<compile_context>
chip_gen: v7x
topology: tpu7x:2x2x1
jax: 0.10.0
libtpu: 0.0.40
codegen_flags: <defaults>
</compile_context>

<pallas_src>
import jax
import jax.numpy as jnp
import numpy as np
from jax import lax
from jax.experimental import pallas as pl
from jax.experimental.pallas import tpu as pltpu

_LANES = 128


def _round_up(x, m):
    return ((x + m - 1) // m) * m


def _make_sepconv_kernel(*, C, H, W, KH, KW, pad, dil, S, Ho, Wo,
                         data_row0, row_base, pw_shifts):
    """Kernel body with all static conv geometry closed over."""

    def kernel(x_ref, dwl_ref, pwl_ref, pbl_ref, o_ref, xpad_ref):
        # x_ref   : (1, C, H, W)     one sample, NCHW, VMEM
        # dwl_ref : (KH*KW, 128)     depthwise tap weights, lane-replicated per channel segment
        # pwl_ref : (n_shifts, 128)  pointwise weights, one lane vector per roll amount
        # pbl_ref : (1, 128)         effective bias (pointwise bias + pointwise(depthwise bias))
        # o_ref   : (1, Ho, 128)     output tile, lane = co*Wo + ow (lane-dense)
        # xpad_ref: (Hscr, 128)      zero-padded input, channel c packed at lanes [c*S, c*S+Wp)

        # ---- stage the input --------------------------------------------------
        # Whole-scratch memset: Hscr/8 unmasked full-vreg stores -- cheaper and
        # simpler than masked border-only zeroing at this scratch size.
        xpad_ref[...] = jnp.zeros_like(xpad_ref)
        # data_row0 is 8-aligned, so the bulk (H, W) copies are sublane-aligned;
        # the `pad` zero rows sit just above data_row0 and stay zero.
        for c in range(C):
            xpad_ref[data_row0:data_row0 + H, c * S + pad:c * S + pad + W] = (
                x_ref[0, c].astype(jnp.float32))

        # ---- depthwise KxK conv (stride 1) ------------------------------------
        # Channels live side by side on the lane axis, so each tap is one vector
        # FMA covering all C channels; the column shift is a pltpu.roll (XLU
        # slot) and the row-window load is reused across the KW taps.
        dacc = None
        for i in range(KH):
            r0 = row_base + i * dil
            rows = xpad_ref[r0:r0 + Ho, :]                          # (Ho, 128)
            for j in range(KW):
                t = i * KW + j
                shifted = rows if j == 0 else pltpu.roll(
                    rows, shift=(_LANES - j * dil) % _LANES, axis=1)
                term = shifted * dwl_ref[t:t + 1, :]                # (Ho,128)*(1,128)
                dacc = term if dacc is None else dacc + term

        # ---- pointwise 1x1 conv ------------------------------------------------
        # O[:, co*Wo+ow] = sum_c pw[c, co] * D[:, c*S+ow].  Each (c, co) pair is
        # a lane rotation of D by (co*Wo - c*S) mod 128; grouping the pairs by
        # rotation amount needs only len(pw_shifts) roll+FMA steps and produces
        # the lane-dense output layout directly (no reshape / concatenate).
        pacc = None
        for k, r in enumerate(pw_shifts):
            src = dacc if r == 0 else pltpu.roll(dacc, shift=r, axis=1)
            term = src * pwl_ref[k:k + 1, :]
            pacc = term if pacc is None else pacc + term
        pacc = pacc + pbl_ref[...]                                  # + (1, 128) bias

        o_ref[0] = pacc.astype(o_ref.dtype)                         # full-tile store

    return kernel


def separable_conv2d(x_nchw, dw_w, dw_b, pw_w, pw_b,
                     *, stride=1, padding=0, dilation=1):
    """SeparableConv2d forward.

    x_nchw: (N, C, H, W)
    dw_w  : (KH, KW, C)   depthwise weight (torch (C,1,KH,KW) -> (KH,KW,C))
    dw_b  : (C,)
    pw_w  : (C, Cout)     pointwise weight (torch (Cout,C,1,1) -> (C,Cout))
    pw_b  : (Cout,)
    """
    N, C, H, W = x_nchw.shape
    KH, KW, _ = dw_w.shape
    Cout = pw_w.shape[1]

    if stride != 1:
        # TODO(synk): stride > 1 needs a lane-subsampled output packing.
        raise NotImplementedError("separable_conv2d Pallas kernel: stride must be 1")

    Ho = (H + 2 * padding - dilation * (KH - 1) - 1) // stride + 1
    Wo = (W + 2 * padding - dilation * (KW - 1) - 1) // stride + 1
    Wp = W + 2 * padding
    S = _LANES // C if C <= _LANES else 0        # lane segment per input channel

    if S < Wp or Cout * Wo > _LANES:
        # TODO(synk): block W / Cout across grid steps, H-block the input
        # (v7x: 64 MiB VMEM) and use a bf16 MXU pointwise at production sizes.
        raise NotImplementedError(
            "separable_conv2d Pallas kernel: channel/width packing does not fit "
            f"128 lanes (C={C}, W+2p={Wp}, Cout*Wo={Cout * Wo})")

    data_row0 = _round_up(padding, 8)            # 8-aligned first data row in scratch
    row_base = data_row0 - padding               # scratch row holding padded row 0
    Hscr = _round_up(row_base + H + 2 * padding, 8)

    # --- tiny host-side parameter re-layouts (weights only, no activation traffic) ---
    # Depthwise tap weights, replicated across each channel's lane segment.
    dwl = jnp.repeat(dw_w.reshape(KH * KW, C).astype(jnp.float32), S, axis=1)
    if C * S < _LANES:
        dwl = jnp.pad(dwl, ((0, 0), (0, _LANES - C * S)))

    # Pointwise: group the (c, co) pairs by lane-rotation amount and build one
    # weight lane-vector per rotation (exact gather -- no dot, no truncation).
    shift_pairs = {}
    for co in range(Cout):
        for c in range(C):
            r = (co * Wo - c * S) % _LANES
            shift_pairs.setdefault(r, []).append((c, co))
    pw_shifts = sorted(shift_pairs)
    n_shifts = len(pw_shifts)
    c_idx = np.zeros((n_shifts, _LANES), np.int32)
    co_idx = np.zeros((n_shifts, _LANES), np.int32)
    valid = np.zeros((n_shifts, _LANES), bool)
    for k, r in enumerate(pw_shifts):
        for c, co in shift_pairs[r]:
            c_idx[k, co * Wo:(co + 1) * Wo] = c
            co_idx[k, co * Wo:(co + 1) * Wo] = co
            valid[k, co * Wo:(co + 1) * Wo] = True
    pw_f32 = pw_w.astype(jnp.float32)
    pwl = jnp.where(jnp.asarray(valid), pw_f32[c_idx, co_idx], 0.0)

    # Effective bias: pointwise bias + pointwise applied to the depthwise bias
    # (computed elementwise in f32 -- no reduced-precision dot).
    pb_eff = pw_b.astype(jnp.float32) + jnp.sum(
        dw_b.astype(jnp.float32)[:, None] * pw_f32, axis=0)
    pbl = jnp.concatenate(
        [jnp.repeat(pb_eff, Wo),
         jnp.zeros((_LANES - Cout * Wo,), jnp.float32)])[None, :]

    kernel = _make_sepconv_kernel(
        C=C, H=H, W=W, KH=KH, KW=KW, pad=padding, dil=dilation, S=S,
        Ho=Ho, Wo=Wo, data_row0=data_row0, row_base=row_base,
        pw_shifts=pw_shifts)

    out_flat = pl.pallas_call(
        kernel,
        out_shape=jax.ShapeDtypeStruct((N, Ho, _LANES), x_nchw.dtype),
        grid_spec=pltpu.PrefetchScalarGridSpec(
            num_scalar_prefetch=0,
            grid=(N,),
            in_specs=[
                pl.BlockSpec((1, C, H, W), lambda n: (n, 0, 0, 0)),
                pl.BlockSpec((KH * KW, _LANES), lambda n: (0, 0)),
                pl.BlockSpec((n_shifts, _LANES), lambda n: (0, 0)),
                pl.BlockSpec((1, _LANES), lambda n: (0, 0)),
            ],
            out_specs=pl.BlockSpec((1, Ho, _LANES), lambda n: (n, 0, 0)),
            scratch_shapes=[pltpu.VMEM((Hscr, _LANES), jnp.float32)],
        ),
        compiler_params=pltpu.CompilerParams(
            dimension_semantics=("parallel",)),
    )(x_nchw, dwl, pwl, pbl)

    # Layout plumbing only (16 KB): slice off lane padding (if any) and go back
    # to NCHW; the kernel keeps a lane-dense, unmasked (Ho, 128) store.
    out = out_flat if Cout * Wo == _LANES else out_flat[:, :, :Cout * Wo]
    out = out.reshape(N, Ho, Cout, Wo)
    return jnp.transpose(out, (0, 2, 1, 3))


def _reference(x_nchw, dw_w, dw_b, pw_w, pw_b, *, stride, padding, dilation):
    """Pure-JAX reference using lax.conv_general_dilated (NCHW)."""
    C = x_nchw.shape[1]
    dw_torch = jnp.transpose(dw_w, (2, 0, 1))[:, None, :, :]        # (C,1,KH,KW)
    y = lax.conv_general_dilated(
        x_nchw, dw_torch,
        window_strides=(stride, stride),
        padding=((padding, padding), (padding, padding)),
        rhs_dilation=(dilation, dilation),
        dimension_numbers=("NCHW", "OIHW", "NCHW"),
        feature_group_count=C,
    ) + dw_b[None, :, None, None]
    pw_torch = jnp.transpose(pw_w, (1, 0))[:, :, None, None]        # (Cout,C,1,1)
    z = lax.conv_general_dilated(
        y, pw_torch,
        window_strides=(1, 1),
        padding=((0, 0), (0, 0)),
        dimension_numbers=("NCHW", "OIHW", "NCHW"),
    ) + pw_b[None, :, None, None]
    return z


if __name__ == "__main__":
    # SeparableConv2d(in_channels=4, out_channels=8, kernel_size=3,
    #                 stride=1, padding=1, dilation=1, bias=True)
    N, C, H, W = 2, 4, 16, 16
    Cout, K = 8, 3
    stride, padding, dilation = 1, 1, 1

    key = jax.random.PRNGKey(0)
    kx, k1, k2, k3, k4 = jax.random.split(key, 5)

    x = jax.random.normal(kx, (N, C, H, W), dtype=jnp.float32)
    dw_w = jax.random.normal(k1, (K, K, C), dtype=jnp.float32) * 0.1   # depthwise weight
    dw_b = jax.random.normal(k2, (C,), dtype=jnp.float32) * 0.1        # depthwise bias
    pw_w = jax.random.normal(k3, (C, Cout), dtype=jnp.float32) * 0.1   # pointwise weight
    pw_b = jax.random.normal(k4, (Cout,), dtype=jnp.float32) * 0.1     # pointwise bias

    out = separable_conv2d(x, dw_w, dw_b, pw_w, pw_b,
                           stride=stride, padding=padding, dilation=dilation)
    out = jax.block_until_ready(out)

    ref = _reference(x, dw_w, dw_b, pw_w, pw_b,
                     stride=stride, padding=padding, dilation=dilation)
    assert out.shape == (N, Cout, H, W), out.shape
    err = float(jnp.max(jnp.abs(out - ref)))
    assert jnp.allclose(out, ref, atol=1e-4, rtol=1e-4), err

    print("KERNEL_OK")
</pallas_src>

<mosaic_0001>
module attributes {stable_mosaic.version = 11 : i64} {
  func.func @kernel(%arg0: i32, %arg1: memref<1x4x16x16xf32, #tpu.memory_space<vmem>>, %arg2: memref<9x128xf32, #tpu.memory_space<vmem>>, %arg3: memref<8x128xf32, #tpu.memory_space<vmem>>, %arg4: memref<1x128xf32, #tpu.memory_space<vmem>>, %arg5: memref<1x16x128xf32, #tpu.memory_space<vmem>>, %arg6: memref<32x128xf32, #tpu.memory_space<vmem>>) attributes {dimension_semantics = [#tpu.dimension_semantics<parallel>], iteration_bounds = array<i64: 2>, scalar_prefetch = 0 : i64, scratch_operands = 1 : i64, tpu.core_type = #tpu.core_type<tc>, window_params = [{transform_indices = @transform_0, window_bounds = array<i64: 1, 4, 16, 16>}, {pipeline_mode = #tpu.pipeline_mode<synchronous>, transform_indices = @transform_1, window_bounds = array<i64: 9, 128>}, {pipeline_mode = #tpu.pipeline_mode<synchronous>, transform_indices = @transform_2, window_bounds = array<i64: 8, 128>}, {pipeline_mode = #tpu.pipeline_mode<synchronous>, transform_indices = @transform_3, window_bounds = array<i64: 1, 128>}, {transform_indices = @transform_4, window_bounds = array<i64: 1, 16, 128>}]} {
    %cst = arith.constant 0.000000e+00 : f32
    %0 = vector.broadcast %cst : f32 to vector<32x128xf32>
    %c0 = arith.constant 0 : index
    %c0_0 = arith.constant 0 : index
    %1 = vector.load %arg6[%c0, %c0_0] : memref<32x128xf32, #tpu.memory_space<vmem>>, vector<32x128xf32>
    tpu.vector_store %arg6[%c0, %c0_0], %0 {strides = array<i32>} : memref<32x128xf32, #tpu.memory_space<vmem>>, vector<32x128xf32>,
    %c0_1 = arith.constant 0 : index
    %c0_2 = arith.constant 0 : index
    %c0_3 = arith.constant 0 : index
    %c0_4 = arith.constant 0 : index
    %2 = vector.load %arg1[%c0_1, %c0_2, %c0_3, %c0_4] : memref<1x4x16x16xf32, #tpu.memory_space<vmem>>, vector<1x1x16x16xf32>
    %3 = vector.shape_cast %2 : vector<1x1x16x16xf32> to vector<16x16xf32>
    %c8 = arith.constant 8 : index
    %c1 = arith.constant 1 : index
    %4 = vector.load %arg6[%c8, %c1] : memref<32x128xf32, #tpu.memory_space<vmem>>, vector<16x16xf32>
    tpu.vector_store %arg6[%c8, %c1], %3 {strides = array<i32>} : memref<32x128xf32, #tpu.memory_space<vmem>>, vector<16x16xf32>,
    %c0_5 = arith.constant 0 : index
    %c1_6 = arith.constant 1 : index
    %c0_7 = arith.constant 0 : index
    %c0_8 = arith.constant 0 : index
    %5 = vector.load %arg1[%c0_5, %c1_6, %c0_7, %c0_8] : memref<1x4x16x16xf32, #tpu.memory_space<vmem>>, vector<1x1x16x16xf32>
    %6 = vector.shape_cast %5 : vector<1x1x16x16xf32> to vector<16x16xf32>
    %c8_9 = arith.constant 8 : index
    %c33 = arith.constant 33 : index
    %7 = vector.load %arg6[%c8_9, %c33] : memref<32x128xf32, #tpu.memory_space<vmem>>, vector<16x16xf32>
    tpu.vector_store %arg6[%c8_9, %c33], %6 {strides = array<i32>} : memref<32x128xf32, #tpu.memory_space<vmem>>, vector<16x16xf32>,
    %c0_10 = arith.constant 0 : index
    %c2 = arith.constant 2 : index
    %c0_11 = arith.constant 0 : index
    %c0_12 = arith.constant 0 : index
    %8 = vector.load %arg1[%c0_10, %c2, %c0_11, %c0_12] : memref<1x4x16x16xf32, #tpu.memory_space<vmem>>, vector<1x1x16x16xf32>
    %9 = vector.shape_cast %8 : vector<1x1x16x16xf32> to vector<16x16xf32>
    %c8_13 = arith.constant 8 : index
    %c65 = arith.constant 65 : index
    %10 = vector.load %arg6[%c8_13, %c65] : memref<32x128xf32, #tpu.memory_space<vmem>>, vector<16x16xf32>
    tpu.vector_store %arg6[%c8_13, %c65], %9 {strides = array<i32>} : memref<32x128xf32, #tpu.memory_space<vmem>>, vector<16x16xf32>,
    %c0_14 = arith.constant 0 : index
    %c3 = arith.constant 3 : index
    %c0_15 = arith.constant 0 : index
    %c0_16 = arith.constant 0 : index
    %11 = vector.load %arg1[%c0_14, %c3, %c0_15, %c0_16] : memref<1x4x16x16xf32, #tpu.memory_space<vmem>>, vector<1x1x16x16xf32>
    %12 = vector.shape_cast %11 : vector<1x1x16x16xf32> to vector<16x16xf32>
    %c8_17 = arith.constant 8 : index
    %c97 = arith.constant 97 : index
    %13 = vector.load %arg6[%c8_17, %c97] : memref<32x128xf32, #tpu.memory_space<vmem>>, vector<16x16xf32>
    tpu.vector_store %arg6[%c8_17, %c97], %12 {strides = array<i32>} : memref<32x128xf32, #tpu.memory_space<vmem>>, vector<16x16xf32>,
    %c7 = arith.constant 7 : index
    %c0_18 = arith.constant 0 : index
    %14 = vector.load %arg6[%c7, %c0_18] : memref<32x128xf32, #tpu.memory_space<vmem>>, vector<16x128xf32>
    %c0_19 = arith.constant 0 : index
    %c0_20 = arith.constant 0 : index
    %15 = vector.load %arg2[%c0_19, %c0_20] : memref<9x128xf32, #tpu.memory_space<vmem>>, vector<1x128xf32>
    %16 = vector.broadcast %15 : vector<1x128xf32> to vector<16x128xf32>
    %17 = arith.mulf %14, %16 : vector<16x128xf32>
    %c127_i32 = arith.constant 127 : i32
    %18 = tpu.dynamic_rotate %14 by %c127_i32 dim 1 : vector<16x128xf32>, i32 -> vector<16x128xf32>
    %c1_21 = arith.constant 1 : index
    %c0_22 = arith.constant 0 : index
    %19 = vector.load %arg2[%c1_21, %c0_22] : memref<9x128xf32, #tpu.memory_space<vmem>>, vector<1x128xf32>
    %20 = vector.broadcast %19 : vector<1x128xf32> to vector<16x128xf32>
    %21 = arith.mulf %18, %20 : vector<16x128xf32>
    %22 = arith.addf %17, %21 : vector<16x128xf32>
    %c126_i32 = arith.constant 126 : i32
    %23 = tpu.dynamic_rotate %14 by %c126_i32 dim 1 : vector<16x128xf32>, i32 -> vector<16x128xf32>
    %c2_23 = arith.constant 2 : index
    %c0_24 = arith.constant 0 : index
    %24 = vector.load %arg2[%c2_23, %c0_24] : memref<9x128xf32, #tpu.memory_space<vmem>>, vector<1x128xf32>
    %25 = vector.broadcast %24 : vector<1x128xf32> to vector<16x128xf32>
    %26 = arith.mulf %23, %25 : vector<16x128xf32>
    %27 = arith.addf %22, %26 : vector<16x128xf32>
    %c8_25 = arith.constant 8 : index
    %c0_26 = arith.constant 0 : index
    %28 = vector.load %arg6[%c8_25, %c0_26] : memref<32x128xf32, #tpu.memory_space<vmem>>, vector<16x128xf32>
    %c3_27 = arith.constant 3 : index
    %c0_28 = arith.constant 0 : index
    %29 = vector.load %arg2[%c3_27, %c0_28] : memref<9x128xf32, #tpu.memory_space<vmem>>, vector<1x128xf32>
    %30 = vector.broadcast %29 : vector<1x128xf32> to vector<16x128xf32>
    %31 = arith.mulf %28, %30 : vector<16x128xf32>
    %32 = arith.addf %27, %31 : vector<16x128xf32>
    %c127_i32_29 = arith.constant 127 : i32
    %33 = tpu.dynamic_rotate %28 by %c127_i32_29 dim 1 : vector<16x128xf32>, i32 -> vector<16x128xf32>
    %c4 = arith.constant 4 : index
    %c0_30 = arith.constant 0 : index
    %34 = vector.load %arg2[%c4, %c0_30] : memref<9x128xf32, #tpu.memory_space<vmem>>, vector<1x128xf32>
    %35 = vector.broadcast %34 : vector<1x128xf32> to vector<16x128xf32>
    %36 = arith.mulf %33, %35 : vector<16x128xf32>
    %37 = arith.addf %32, %36 : vector<16x128xf32>
    %c126_i32_31 = arith.constant 126 : i32
    %38 = tpu.dynamic_rotate %28 by %c126_i32_31 dim 1 : vector<16x128xf32>, i32 -> vector<16x128xf32>
    %c5 = arith.constant 5 : index
    %c0_32 = arith.constant 0 : index
    %39 = vector.load %arg2[%c5, %c0_32] : memref<9x128xf32, #tpu.memory_space<vmem>>, vector<1x128xf32>
    %40 = vector.broadcast %39 : vector<1x128xf32> to vector<16x128xf32>
    %41 = arith.mulf %38, %40 : vector<16x128xf32>
    %42 = arith.addf %37, %41 : vector<16x128xf32>
    %c9 = arith.constant 9 : index
    %c0_33 = arith.constant 0 : index
    %43 = vector.load %arg6[%c9, %c0_33] : memref<32x128xf32, #tpu.memory_space<vmem>>, vector<16x128xf32>
    %c6 = arith.constant 6 : index
    %c0_34 = arith.constant 0 : index
    %44 = vector.load %arg2[%c6, %c0_34] : memref<9x128xf32, #tpu.memory_space<vmem>>, vector<1x128xf32>
    %45 = vector.broadcast %44 : vector<1x128xf32> to vector<16x128xf32>
    %46 = arith.mulf %43, %45 : vector<16x128xf32>
    %47 = arith.addf %42, %46 : vector<16x128xf32>
    %c127_i32_35 = arith.constant 127 : i32
    %48 = tpu.dynamic_rotate %43 by %c127_i32_35 dim 1 : vector<16x128xf32>, i32 -> vector<16x128xf32>
    %c7_36 = arith.constant 7 : index
    %c0_37 = arith.constant 0 : index
    %49 = vector.load %arg2[%c7_36, %c0_37] : memref<9x128xf32, #tpu.memory_space<vmem>>, vector<1x128xf32>
    %50 = vector.broadcast %49 : vector<1x128xf32> to vector<16x128xf32>
    %51 = arith.mulf %48, %50 : vector<16x128xf32>
    %52 = arith.addf %47, %51 : vector<16x128xf32>
    %c126_i32_38 = arith.constant 126 : i32
    %53 = tpu.dynamic_rotate %43 by %c126_i32_38 dim 1 : vector<16x128xf32>, i32 -> vector<16x128xf32>
    %c8_39 = arith.constant 8 : index
    %c0_40 = arith.constant 0 : index
    %54 = vector.load %arg2[%c8_39, %c0_40] : memref<9x128xf32, #tpu.memory_space<vmem>>, vector<1x128xf32>
    %55 = vector.broadcast %54 : vector<1x128xf32> to vector<16x128xf32>
    %56 = arith.mulf %53, %55 : vector<16x128xf32>
    %57 = arith.addf %52, %56 : vector<16x128xf32>
    %c0_41 = arith.constant 0 : index
    %c0_42 = arith.constant 0 : index
    %58 = vector.load %arg3[%c0_41, %c0_42] : memref<8x128xf32, #tpu.memory_space<vmem>>, vector<1x128xf32>
    %59 = vector.broadcast %58 : vector<1x128xf32> to vector<16x128xf32>
    %60 = arith.mulf %57, %59 : vector<16x128xf32>
    %c16_i32 = arith.constant 16 : i32
    %61 = tpu.dynamic_rotate %57 by %c16_i32 dim 1 : vector<16x128xf32>, i32 -> vector<16x128xf32>
    %c1_43 = arith.constant 1 : index
    %c0_44 = arith.constant 0 : index
    %62 = vector.load %arg3[%c1_43, %c0_44] : memref<8x128xf32, #tpu.memory_space<vmem>>, vector<1x128xf32>
    %63 = vector.broadcast %62 : vector<1x128xf32> to vector<16x128xf32>
    %64 = arith.mulf %61, %63 : vector<16x128xf32>
    %65 = arith.addf %60, %64 : vector<16x128xf32>
    %c32_i32 = arith.constant 32 : i32
    %66 = tpu.dynamic_rotate %57 by %c32_i32 dim 1 : vector<16x128xf32>, i32 -> vector<16x128xf32>
    %c2_45 = arith.constant 2 : index
    %c0_46 = arith.constant 0 : index
    %67 = vector.load %arg3[%c2_45, %c0_46] : memref<8x128xf32, #tpu.memory_space<vmem>>, vector<1x128xf32>
    %68 = vector.broadcast %67 : vector<1x128xf32> to vector<16x128xf32>
    %69 = arith.mulf %66, %68 : vector<16x128xf32>
    %70 = arith.addf %65, %69 : vector<16x128xf32>
    %c48_i32 = arith.constant 48 : i32
    %71 = tpu.dynamic_rotate %57 by %c48_i32 dim 1 : vector<16x128xf32>, i32 -> vector<16x128xf32>
    %c3_47 = arith.constant 3 : index
    %c0_48 = arith.constant 0 : index
    %72 = vector.load %arg3[%c3_47, %c0_48] : memref<8x128xf32, #tpu.memory_space<vmem>>, vector<1x128xf32>
    %73 = vector.broadcast %72 : vector<1x128xf32> to vector<16x128xf32>
    %74 = arith.mulf %71, %73 : vector<16x128xf32>
    %75 = arith.addf %70, %74 : vector<16x128xf32>
    %c64_i32 = arith.constant 64 : i32
    %76 = tpu.dynamic_rotate %57 by %c64_i32 dim 1 : vector<16x128xf32>, i32 -> vector<16x128xf32>
    %c4_49 = arith.constant 4 : index
    %c0_50 = arith.constant 0 : index
    %77 = vector.load %arg3[%c4_49, %c0_50] : memref<8x128xf32, #tpu.memory_space<vmem>>, vector<1x128xf32>
    %78 = vector.broadcast %77 : vector<1x128xf32> to vector<16x128xf32>
    %79 = arith.mulf %76, %78 : vector<16x128xf32>
    %80 = arith.addf %75, %79 : vector<16x128xf32>
    %c80_i32 = arith.constant 80 : i32
    %81 = tpu.dynamic_rotate %57 by %c80_i32 dim 1 : vector<16x128xf32>, i32 -> vector<16x128xf32>
    %c5_51 = arith.constant 5 : index
    %c0_52 = arith.constant 0 : index
    %82 = vector.load %arg3[%c5_51, %c0_52] : memref<8x128xf32, #tpu.memory_space<vmem>>, vector<1x128xf32>
    %83 = vector.broadcast %82 : vector<1x128xf32> to vector<16x128xf32>
    %84 = arith.mulf %81, %83 : vector<16x128xf32>
    %85 = arith.addf %80, %84 : vector<16x128xf32>
    %c96_i32 = arith.constant 96 : i32
    %86 = tpu.dynamic_rotate %57 by %c96_i32 dim 1 : vector<16x128xf32>, i32 -> vector<16x128xf32>
    %c6_53 = arith.constant 6 : index
    %c0_54 = arith.constant 0 : index
    %87 = vector.load %arg3[%c6_53, %c0_54] : memref<8x128xf32, #tpu.memory_space<vmem>>, vector<1x128xf32>
    %88 = vector.broadcast %87 : vector<1x128xf32> to vector<16x128xf32>
    %89 = arith.mulf %86, %88 : vector<16x128xf32>
    %90 = arith.addf %85, %89 : vector<16x128xf32>
    %c112_i32 = arith.constant 112 : i32
    %91 = tpu.dynamic_rotate %57 by %c112_i32 dim 1 : vector<16x128xf32>, i32 -> vector<16x128xf32>
    %c7_55 = arith.constant 7 : index
    %c0_56 = arith.constant 0 : index
    %92 = vector.load %arg3[%c7_55, %c0_56] : memref<8x128xf32, #tpu.memory_space<vmem>>, vector<1x128xf32>
    %93 = vector.broadcast %92 : vector<1x128xf32> to vector<16x128xf32>
    %94 = arith.mulf %91, %93 : vector<16x128xf32>
    %95 = arith.addf %90, %94 : vector<16x128xf32>
    %c0_57 = arith.constant 0 : index
    %c0_58 = arith.constant 0 : index
    %96 = vector.load %arg4[%c0_57, %c0_58] : memref<1x128xf32, #tpu.memory_space<vmem>>, vector<1x128xf32>
    %97 = vector.broadcast %96 : vector<1x128xf32> to vector<16x128xf32>
    %98 = arith.addf %95, %97 : vector<16x128xf32>
    %c0_59 = arith.constant 0 : index
    %c0_60 = arith.constant 0 : index
    %c0_61 = arith.constant 0 : index
    %99 = vector.load %arg5[%c0_59, %c0_60, %c0_61] : memref<1x16x128xf32, #tpu.memory_space<vmem>>, vector<1x16x128xf32>
    %100 = vector.shape_cast %99 : vector<1x16x128xf32> to vector<16x128xf32>
    %101 = vector.shape_cast %98 : vector<16x128xf32> to vector<1x16x128xf32>
    tpu.vector_store %arg5[%c0_59, %c0_60, %c0_61], %101 {strides = array<i32>} : memref<1x16x128xf32, #tpu.memory_space<vmem>>, vector<1x16x128xf32>,
    return
  }
  func.func @transform_0(%arg0: i32) -> (i32, i32, i32, i32) {
    %c0_i32 = arith.constant 0 : i32
    %c0_i32_0 = arith.constant 0 : i32
    %c0_i32_1 = arith.constant 0 : i32
    %c0_i32_2 = arith.constant 0 : i32
    return %arg0, %c0_i32, %c0_i32_0, %c0_i32_1 : i32, i32, i32, i32
  }
  func.func @transform_1(%arg0: i32) -> (i32, i32) {
    %c0_i32 = arith.constant 0 : i32
    %c0_i32_0 = arith.constant 0 : i32
    %c0_i32_1 = arith.constant 0 : i32
    return %c0_i32, %c0_i32_0 : i32, i32
  }
  func.func @transform_2(%arg0: i32) -> (i32, i32) {
    %c0_i32 = arith.constant 0 : i32
    %c0_i32_0 = arith.constant 0 : i32
    %c0_i32_1 = arith.constant 0 : i32
    return %c0_i32, %c0_i32_0 : i32, i32
  }
  func.func @transform_3(%arg0: i32) -> (i32, i32) {
    %c0_i32 = arith.constant 0 : i32
    %c0_i32_0 = arith.constant 0 : i32
    %c0_i32_1 = arith.constant 0 : i32
    return %c0_i32, %c0_i32_0 : i32, i32
  }
  func.func @transform_4(%arg0: i32) -> (i32, i32, i32) {
    %c0_i32 = arith.constant 0 : i32
    %c0_i32_0 = arith.constant 0 : i32
    %c0_i32_1 = arith.constant 0 : i32
    return %arg0, %c0_i32, %c0_i32_0 : i32, i32, i32
  }
}

</mosaic_0001>

<llo_original>
// kernel: tpu_custom_call.1
$region0: #{tpu_custom_call.1}
  #allocation0 [shape = 'u32[]', space=smem, size = 0x4, offset = 0x4, fixed_abs, tag = 'smem constant byte address 0x4 - core index']
  #allocation1 [shape = 'u32[144,128]{1,0:T(1,128)}', space=vmem, size = 0x12000, scoped, tag = 'internal scratch']
  #allocation2 [shape = 'f32[32,128]{1,0:T(8,128)}', space=vmem, size = 0x4000, scoped, tag = 'scratch operand']
  %s0 = inlined_call_operand.hbm [shape: f32[2,4,16,16], index: 0, kind: input, shape index: {}]
  %s1 = inlined_call_operand.hbm [shape: f32[9,128], index: 1, kind: input, shape index: {}]
  %s2 = inlined_call_operand.hbm [shape: f32[8,128], index: 2, kind: input, shape index: {}]
  %s3 = inlined_call_operand.vmem [shape: f32[1,128], index: 3, kind: input, shape index: {}]
  %s4 = inlined_call_operand.hbm [shape: f32[2,16,128], index: 4, kind: output, shape index: {}]
  %s5 = sld [smem:[#allocation0]]
  $region61: #{tpu_custom_call.1} parent=0
    _
  %s7 = ssub.s32 1, %s5
  %s8 = scalar_select 0, %s7, %s5
  $region1: #{tpu_custom_call.1} parent=0
    #allocation3 [shape = 'u8[65536]{0}', space=vmem, size = 0x10000, scoped, tag = 'input window, operand 0']
    #allocation4 [shape = 's32[2]{0}', space=sflag, size = 0x8, scoped, tag = 'scoped memory for tpu_custom_call.1']
    #allocation5 [shape = 's32[2]{0}', space=sflag, size = 0x8, scoped, tag = 'scoped memory for tpu_custom_call.1']
    #allocation6 [shape = 'u8[8192]{0}', space=vmem, size = 0x2000, scoped, tag = 'input window, operand 1, single buffered']
    #allocation7 [shape = 's32[1]{0}', space=sflag, size = 0x4, scoped, tag = 'scoped memory for tpu_custom_call.1']
    #allocation8 [shape = 'u8[4096]{0}', space=vmem, size = 0x1000, scoped, tag = 'input window, operand 2, single buffered']
    #allocation9 [shape = 'u8[16384]{0}', space=vmem, size = 0x4000, scoped, tag = 'output window, operand 0']
    %9 = vsyncpa [#allocation4], 0
    %s10 = scalar_lea.sflag [#allocation4], 1
    %11 = vsyncpa %s10, 0
    %12 = vsyncpa [#allocation7], 0
    %13 = vsyncpa [#allocation5], 0
    %s14 = scalar_lea.sflag [#allocation5], 1
    %15 = vsyncpa %s14, 0
    loop: start=0, step=1, limit=4
    $region2: #{tpu_custom_call.1} parent=1 // loop_pre_header
      _
    $region3: #{tpu_custom_call.1} parent=1 // loop_header
      %s17 = sphi 0, %s21
      %p18 = scmp.ge.s32.totalorder %s17, 4
      %s27 = sphi 0, %s29
      %s30 = sphi 0, %s27
      %s31 = sphi 0, %s30
      %s47 = sphi 0, %s31
      %s51 = sphi 0, %s51
      %s53 = sphi 0, %s51
      %s54 = sphi 0, %s53
      %s68 = sphi 0, %s54
      %s72 = sphi 0, %s72
      %s74 = sphi 0, %s72
      %s75 = sphi 0, %s74
      %s89 = sphi 0, %s75
      %s93 = sphi 0, %s93
      %s95 = sphi 0, %s93
      %s96 = sphi 0, %s95
      %s110 = sphi 0, %s96
      %s116 = sphi 0, %s118
      %s119 = sphi 0, %s116
      %s120 = sphi 0, %s119
      %s136 = sphi 0, %s120
    $region4: #{tpu_custom_call.1} parent=1 // loop_header_branch
      %20 = sbr.rel (%p18) target = $region8
    $region5: #{tpu_custom_call.1} parent=1 // loop_body
      %s22 = ssub.s32 %s17, 1
      %s23 = ssub.s32 %s17, 2
      %s24 = sadd.s32 %s17, 1
      %s25 = ssub.s32 %s17, %s24
      %p26 = scmp.eq.s32.totalorder %s25, 0
      %s28 = sadd.s32 %s27, 1
      %s29 = scalar_select %p26, %s27, %s28
      %p32 = pneg %p26
      %p33 = scmp.eq.s32.totalorder %s17, 1
      %p34 = por %p32, %p33
      %p35 = scmp.ne.s32.totalorder %s27, %s30
      %p36 = scmp.eq.s32.totalorder %s17, 0
      %p37 = por %p35, %p36
      %p38 = scmp.ne.s32.totalorder %s27, %s30
      %p39 = scmp.eq.s32.totalorder %s22, 1
      %p40 = por %p38, %p39
      %p41 = scmp.ne.s32.totalorder %s30, %s31
      %p42 = scmp.eq.s32.totalorder %s22, 0
      %p43 = por %p41, %p42
      %p44 = scmp.ne.s32.totalorder %s30, %s31
      %p45 = scmp.eq.s32.totalorder %s23, 1
      %p46 = por %p44, %p45
      %p48 = scmp.ne.s32.totalorder %s31, %s47
      %p49 = scmp.eq.s32.totalorder %s23, 0
      %p50 = por %p48, %p49
      %s52 = sadd.s32 %s51, 1
      %p55 = scmp.eq.s32.totalorder %s17, 1
      %p56 = scmp.ne.s32.totalorder %s51, %s53
      %p57 = scmp.eq.s32.totalorder %s17, 0
      %p58 = por %p56, %p57
      %p59 = scmp.ne.s32.totalorder %s51, %s53
      %p60 = scmp.eq.s32.totalorder %s22, 1
      %p61 = por %p59, %p60
      %p62 = scmp.ne.s32.totalorder %s53, %s54
      %p63 = scmp.eq.s32.totalorder %s22, 0
      %p64 = por %p62, %p63
      %p65 = scmp.ne.s32.totalorder %s53, %s54
      %p66 = scmp.eq.s32.totalorder %s23, 1
      %p67 = por %p65, %p66
      %p69 = scmp.ne.s32.totalorder %s54, %s68
      %p70 = scmp.eq.s32.totalorder %s23, 0
      %p71 = por %p69, %p70
      %s73 = sadd.s32 %s72, 1
      %p76 = scmp.eq.s32.totalorder %s17, 1
      %p77 = scmp.ne.s32.totalorder %s72, %s74
      %p78 = scmp.eq.s32.totalorder %s17, 0
      %p79 = por %p77, %p78
      %p80 = scmp.ne.s32.totalorder %s72, %s74
      %p81 = scmp.eq.s32.totalorder %s22, 1
      %p82 = por %p80, %p81
      %p83 = scmp.ne.s32.totalorder %s74, %s75
      %p84 = scmp.eq.s32.totalorder %s22, 0
      %p85 = por %p83, %p84
      %p86 = scmp.ne.s32.totalorder %s74, %s75
      %p87 = scmp.eq.s32.totalorder %s23, 1
      %p88 = por %p86, %p87
      %p90 = scmp.ne.s32.totalorder %s75, %s89
      %p91 = scmp.eq.s32.totalorder %s23, 0
      %p92 = por %p90, %p91
      %s94 = sadd.s32 %s93, 1
      %p97 = scmp.eq.s32.totalorder %s17, 1
      %p98 = scmp.ne.s32.totalorder %s93, %s95
      %p99 = scmp.eq.s32.totalorder %s17, 0
      %p100 = por %p98, %p99
      %p101 = scmp.ne.s32.totalorder %s93, %s95
      %p102 = scmp.eq.s32.totalorder %s22, 1
      %p103 = por %p101, %p102
      %p104 = scmp.ne.s32.totalorder %s95, %s96
      %p105 = scmp.eq.s32.totalorder %s22, 0
      %p106 = por %p104, %p105
      %p107 = scmp.ne.s32.totalorder %s95, %s96
      %p108 = scmp.eq.s32.totalorder %s23, 1
      %p109 = por %p107, %p108
      %p111 = scmp.ne.s32.totalorder %s96, %s110
      %p112 = scmp.eq.s32.totalorder %s23, 0
      %p113 = por %p111, %p112
      %s114 = ssub.s32 %s17, %s24
      %p115 = scmp.eq.s32.totalorder %s114, 0
      %s117 = sadd.s32 %s116, 1
      %s118 = scalar_select %p115, %s116, %s117
      %p121 = pneg %p115
      %p122 = scmp.eq.s32.totalorder %s17, 1
      %p123 = por %p121, %p122
      %p124 = scmp.ne.s32.totalorder %s116, %s119
      %p125 = scmp.eq.s32.totalorder %s17, 0
      %p126 = por %p124, %p125
      %p127 = scmp.ne.s32.totalorder %s116, %s119
      %p128 = scmp.eq.s32.totalorder %s22, 1
      %p129 = por %p127, %p128
      %p130 = scmp.ne.s32.totalorder %s119, %s120
      %p131 = scmp.eq.s32.totalorder %s22, 0
      %p132 = por %p130, %p131
      %p133 = scmp.ne.s32.totalorder %s119, %s120
      %p134 = scmp.eq.s32.totalorder %s23, 1
      %p135 = por %p133, %p134
      %p137 = scmp.ne.s32.totalorder %s120, %s136
      %p138 = scmp.eq.s32.totalorder %s23, 0
      %p139 = por %p137, %p138
      %p140 = scmp.le.s32.totalorder 1, %s17
      %p141 = scmp.lt.s32.totalorder %s17, 3
      %p142 = pnand %p140, %p141
      %p143 = pneg %p142
      // Predicated region
      $region9: #{tpu_custom_call.1} parent=5 // pred_check
        _
      $region10: #{tpu_custom_call.1} parent=5 // pred_check_branch
        %145 = sbr.rel (%p142) target = $region12
      $region11: #{tpu_custom_call.1} parent=5 // pred_region
        %s146 = ssub.s32 %s17, 1
        // Predicated region
        $region13: #{tpu_custom_call.1} parent=11 // pred_check
          %p147 = pneg %p64
        $region14: #{tpu_custom_call.1} parent=11 // pred_check_branch
          %149 = sbr.rel (%p147) target = $region16
        $region15: #{tpu_custom_call.1} parent=11 // pred_region
          %s151 = ssub.s32 256, 256
          %152 = vsyncadd [#allocation7], %s151
          %s153 = sshll.u32 [#allocation6], 4
          %s154 = int_to_ptr.vmem [resolvable:$true] %s153
          %159 = dma.hbm_to_vmem [thread:$0]  %s1, 256, %s154, [#allocation7], 128, 128, 8
        $region16: #{tpu_custom_call.1} parent=11 // pred_fallthru
          _
        // Predicated region
        $region17: #{tpu_custom_call.1} parent=11 // pred_check
          %p160 = pneg %p85
        $region18: #{tpu_custom_call.1} parent=11 // pred_check_branch
          %162 = sbr.rel (%p160) target = $region20
        $region19: #{tpu_custom_call.1} parent=11 // pred_region
          %s164 = ssub.s32 128, 128
          %165 = vsyncadd [#allocation7], %s164
          %s167 = sshll.u32 [#allocation8], 4
          %s168 = int_to_ptr.vmem [resolvable:$true] %s167
          %170 = dma.hbm_to_vmem [thread:$0]  %s2, 128, %s168, [#allocation7]
        $region20: #{tpu_custom_call.1} parent=11 // pred_fallthru
          _
        // Predicated region
        $region21: #{tpu_custom_call.1} parent=11 // pred_check
          %p171 = pneg %p106
        $region22: #{tpu_custom_call.1} parent=11 // pred_check_branch
          %173 = sbr.rel (%p171) target = $region24
        $region23: #{tpu_custom_call.1} parent=11 // pred_region
          _
        $region24: #{tpu_custom_call.1} parent=11 // pred_fallthru
          _
      $region12: #{tpu_custom_call.1} parent=5 // pred_fallthru
        _
      %p174 = scmp.lt.s32.totalorder %s17, 2
      // Predicated region
      $region25: #{tpu_custom_call.1} parent=5 // pred_check
        %p175 = pneg %p174
      $region26: #{tpu_custom_call.1} parent=5 // pred_check_branch
        %177 = sbr.rel (%p175) target = $region28
      $region27: #{tpu_custom_call.1} parent=5 // pred_region
        // Predicated region
        $region29: #{tpu_custom_call.1} parent=27 // pred_check
          %p178 = pneg %p37
        $region30: #{tpu_custom_call.1} parent=27 // pred_check_branch
          %180 = sbr.rel (%p178) target = $region32
        $region31: #{tpu_custom_call.1} parent=27 // pred_region
          %s181 = sand.u32 %s27, 1
          %s182 = scalar_lea.sflag [#allocation4], %s181
          %s183 = sand.u32 %s27, 1
          %s184 = smul.addr %s183, 64
          %s185 = scalar_lea.vmem [#allocation3], %s184
          %s187 = ssub.s32 1024, 1024
          %188 = vsyncadd %s182, %s187
          %s189 = smul.addr %s17, 8
          %s190 = smul.addr %s189, 128
          %s191 = scalar_lea.hbm %s0, %s190
          %s192 = sshll.u32 %s185, 4
          %s193 = int_to_ptr.vmem [resolvable:$true] %s192
          %198 = dma.hbm_to_vmem [thread:$0]  %s191, 1024, %s193, %s182, 128, 128, 8
        $region32: #{tpu_custom_call.1} parent=27 // pred_fallthru
          _
      $region28: #{tpu_custom_call.1} parent=5 // pred_fallthru
        _
      %p199 = scmp.le.s32.totalorder 1, %s17
      %p200 = scmp.lt.s32.totalorder %s17, 3
      %p201 = pnand %p199, %p200
      %p202 = pneg %p201
      // Predicated region
      $region33: #{tpu_custom_call.1} parent=5 // pred_check
        _
      $region34: #{tpu_custom_call.1} parent=5 // pred_check_branch
        %204 = sbr.rel (%p201) target = $region36
      $region35: #{tpu_custom_call.1} parent=5 // pred_region
        %s205 = ssub.s32 %s17, 1
        %s206 = sand.u32 %s30, 1
        %s207 = scalar_lea.sflag [#allocation4], %s206
        %s208 = sand.u32 %s30, 1
        %s209 = smul.addr %s208, 64
        %s210 = scalar_lea.vmem [#allocation3], %s209
        // Predicated region
        $region37: #{tpu_custom_call.1} parent=35 // pred_check
          %p211 = pneg %p43
        $region38: #{tpu_custom_call.1} parent=35 // pred_check_branch
          %213 = sbr.rel (%p211) target = $region40
        $region39: #{tpu_custom_call.1} parent=35 // pred_region
          %214 = dma.done %s207, 1024
        $region40: #{tpu_custom_call.1} parent=35 // pred_fallthru
          _
        // Predicated region
        $region41: #{tpu_custom_call.1} parent=35 // pred_check
          %p215 = pneg %p64
        $region42: #{tpu_custom_call.1} parent=35 // pred_check_branch
          %217 = sbr.rel (%p215) target = $region44
        $region43: #{tpu_custom_call.1} parent=35 // pred_region
          %218 = dma.done [#allocation7], 256
        $region44: #{tpu_custom_call.1} parent=35 // pred_fallthru
          _
        // Predicated region
        $region45: #{tpu_custom_call.1} parent=35 // pred_check
          %p219 = pneg %p85
        $region46: #{tpu_custom_call.1} parent=35 // pred_check_branch
          %221 = sbr.rel (%p219) target = $region48
        $region47: #{tpu_custom_call.1} parent=35 // pred_region
          %222 = dma.done [#allocation7], 128
        $region48: #{tpu_custom_call.1} parent=35 // pred_fallthru
          _
        %s223 = sand.u32 %s30, 1
        %s224 = scalar_lea.sflag [#allocation4], %s223
        %s225 = sand.u32 %s30, 1
        %s226 = smul.addr %s225, 64
        %s227 = scalar_lea.vmem [#allocation3], %s226
        %p228 = pneg %p43
        %p229 = pneg %p40
        %p230 = pneg %p64
        %p231 = pneg %p61
        %p232 = pneg %p85
        %p233 = pneg %p82
        %p234 = pneg %p106
        %p235 = pneg %p103
        %p236 = pneg %p132
        %p237 = pneg %p129
        %s238 = sand.u32 %s119, 1
        %s239 = scalar_lea.sflag [#allocation5], %s238
        %s240 = sand.u32 %s119, 1
        %s241 = smul.addr %s240, 16
        %s242 = scalar_lea.vmem [#allocation9], %s241
        %243 = vst [vmem:[#allocation2] sm:$0xff] 0.0
        %244 = vst [vmem:[#allocation2 + $0x8] sm:$0xff] 0.0
        %245 = vst [vmem:[#allocation2 + $0x10] sm:$0xff] 0.0
        %246 = vst [vmem:[#allocation2 + $0x18] sm:$0xff] 0.0
        %v247 = vld [vmem:[%s210] sm:$0xff]
        %v248 = vld [vmem:[%s210 + $0x8] sm:$0xff]
        %251 = vrot.lane.b32.xlu0 %v247, 1
        %v252 = vpop.permute.xlu0 %251
        %253 = vrot.lane.b32.xlu0 %v248, 1
        %v254 = vpop.permute.xlu0 %253
        %vm257 = vcmask 138248
        %258 = vst.msk [vmem:[#allocation2 + $0x8] sm:$0xff] %vm257, %v252
        %259 = vst.msk [vmem:[#allocation2 + $0x10] sm:$0xff] %vm257, %v254
        %s260 = scalar_lea.vmem %s210, 16 [#allocation3]
        %v261 = vld [vmem:[%s260] sm:$0xff]
        %v262 = vld [vmem:[%s260 + $0x8] sm:$0xff]
        %265 = vrot.lane.b32.xlu0 %v261, 33
        %v266 = vpop.permute.xlu0 %265
        %267 = vrot.lane.b32.xlu0 %v262, 33
        %v268 = vpop.permute.xlu0 %267
        %vm271 = vcmask 400648
        %272 = vst.msk [vmem:[#allocation2 + $0x8] sm:$0xff] %vm271, %v266
        %273 = vst.msk [vmem:[#allocation2 + $0x10] sm:$0xff] %vm271, %v268
        %s274 = scalar_lea.vmem %s210, 32 [#allocation3]
        %v275 = vld [vmem:[%s274] sm:$0xff]
        %v276 = vld [vmem:[%s274 + $0x8] sm:$0xff]
        %279 = vrot.lane.b32.xlu0 %v275, 65
        %v280 = vpop.permute.xlu0 %279
        %281 = vrot.lane.b32.xlu0 %v276, 65
        %v282 = vpop.permute.xlu0 %281
        %vm285 = vcmask 663048
        %286 = vst.msk [vmem:[#allocation2 + $0x8] sm:$0xff] %vm285, %v280
        %287 = vst.msk [vmem:[#allocation2 + $0x10] sm:$0xff] %vm285, %v282
        %s288 = scalar_lea.vmem %s210, 48 [#allocation3]
        %v289 = vld [vmem:[%s288] sm:$0xff]
        %v290 = vld [vmem:[%s288 + $0x8] sm:$0xff]
        %293 = vrot.lane.b32.xlu0 %v289, 97
        %v294 = vpop.permute.xlu0 %293
        %295 = vrot.lane.b32.xlu0 %v290, 97
        %v296 = vpop.permute.xlu0 %295
        %vm299 = vcmask 925448
        %300 = vst.msk [vmem:[#allocation2 + $0x8] sm:$0xff] %vm299, %v294
        %301 = vst.msk [vmem:[#allocation2 + $0x10] sm:$0xff] %vm299, %v296
        %v302 = vld [vmem:[#allocation2 + $0x7] sm:$0xff]
        %v303 = vld [vmem:[#allocation2 + $0xf] sm:$0xff]
        %v304 = vld [vmem:[#allocation6] sm:$0x1]
        %v305 = vlaneseq
        %v306 = vshrl.u32 %v305, 7
        %v307 = vsub.s32 0, %v306
        %v308 = vrot.slane %v304, %v307
        %v309 = vmul.f32 %v302, %v308
        %v310 = vmul.f32 %v303, %v308
        %311 = vrot.lane.b32.xlu0 %v302, 127
        %v312 = vpop.permute.xlu0 %311
        %313 = vrot.lane.b32.xlu0 %v303, 127
        %v314 = vpop.permute.xlu0 %313
        %v315 = vld [vmem:[#allocation6 + $0x1] sm:$0x1]
        %v316 = vlaneseq
        %v317 = vshrl.u32 %v316, 7
        %v318 = vsub.s32 0, %v317
        %v319 = vrot.slane %v315, %v318
        %v320 = vmul.f32 %v312, %v319
        %v321 = vmul.f32 %v314, %v319
        %v322 = vadd.f32 %v309, %v320
        %v323 = vadd.f32 %v310, %v321
        %324 = vrot.lane.b32.xlu0 %v302, 126
        %v325 = vpop.permute.xlu0 %324
        %326 = vrot.lane.b32.xlu0 %v303, 126
        %v327 = vpop.permute.xlu0 %326
        %v328 = vld [vmem:[#allocation6 + $0x2] sm:$0x1]
        %v329 = vlaneseq
        %v330 = vshrl.u32 %v329, 7
        %v331 = vsub.s32 0, %v330
        %v332 = vrot.slane %v328, %v331
        %v333 = vmul.f32 %v325, %v332
        %v334 = vmul.f32 %v327, %v332
        %v335 = vadd.f32 %v322, %v333
        %v336 = vadd.f32 %v323, %v334
        %v337 = vld [vmem:[#allocation2 + $0x8] sm:$0xff]
        %v338 = vld [vmem:[#allocation2 + $0x10] sm:$0xff]
        %v339 = vld [vmem:[#allocation6 + $0x3] sm:$0x1]
        %v340 = vlaneseq
        %v341 = vshrl.u32 %v340, 7
        %v342 = vsub.s32 0, %v341
        %v343 = vrot.slane %v339, %v342
        %v344 = vmul.f32 %v337, %v343
        %v345 = vmul.f32 %v338, %v343
        %v346 = vadd.f32 %v335, %v344
        %v347 = vadd.f32 %v336, %v345
        %348 = vrot.lane.b32.xlu0 %v337, 127
        %v349 = vpop.permute.xlu0 %348
        %350 = vrot.lane.b32.xlu0 %v338, 127
        %v351 = vpop.permute.xlu0 %350
        %v352 = vld [vmem:[#allocation6 + $0x4] sm:$0x1]
        %v353 = vlaneseq
        %v354 = vshrl.u32 %v353, 7
        %v355 = vsub.s32 0, %v354
        %v356 = vrot.slane %v352, %v355
        %v357 = vmul.f32 %v349, %v356
        %v358 = vmul.f32 %v351, %v356
        %v359 = vadd.f32 %v346, %v357
        %v360 = vadd.f32 %v347, %v358
        %361 = vrot.lane.b32.xlu0 %v337, 126
        %v362 = vpop.permute.xlu0 %361
        %363 = vrot.lane.b32.xlu0 %v338, 126
        %v364 = vpop.permute.xlu0 %363
        %v365 = vld [vmem:[#allocation6 + $0x5] sm:$0x1]
        %v366 = vlaneseq
        %v367 = vshrl.u32 %v366, 7
        %v368 = vsub.s32 0, %v367
        %v369 = vrot.slane %v365, %v368
        %v370 = vmul.f32 %v362, %v369
        %v371 = vmul.f32 %v364, %v369
        %v372 = vadd.f32 %v359, %v370
        %v373 = vadd.f32 %v360, %v371
        %v374 = vld [vmem:[#allocation2 + $0x9] sm:$0xff]
        %v375 = vld [vmem:[#allocation2 + $0x11] sm:$0xff]
        %v376 = vld [vmem:[#allocation6 + $0x6] sm:$0x1]
        %v377 = vlaneseq
        %v378 = vshrl.u32 %v377, 7
        %v379 = vsub.s32 0, %v378
        %v380 = vrot.slane %v376, %v379
        %v381 = vmul.f32 %v374, %v380
        %v382 = vmul.f32 %v375, %v380
        %v383 = vadd.f32 %v372, %v381
        %v384 = vadd.f32 %v373, %v382
        %385 = vrot.lane.b32.xlu0 %v374, 127
        %v386 = vpop.permute.xlu0 %385
        %387 = vrot.lane.b32.xlu0 %v375, 127
        %v388 = vpop.permute.xlu0 %387
        %v389 = vld [vmem:[#allocation6 + $0x7] sm:$0x1]
        %v390 = vlaneseq
        %v391 = vshrl.u32 %v390, 7
        %v392 = vsub.s32 0, %v391
        %v393 = vrot.slane %v389, %v392
        %v394 = vmul.f32 %v386, %v393
        %v395 = vmul.f32 %v388, %v393
        %v396 = vadd.f32 %v383, %v394
        %v397 = vadd.f32 %v384, %v395
        %398 = vrot.lane.b32.xlu0 %v374, 126
        %v399 = vpop.permute.xlu0 %398
        %400 = vrot.lane.b32.xlu0 %v375, 126
        %v401 = vpop.permute.xlu0 %400
        %v402 = vld [vmem:[#allocation6 + $0x8] sm:$0x1]
        %v403 = vlaneseq
        %v404 = vshrl.u32 %v403, 7
        %v405 = vsub.s32 0, %v404
        %v406 = vrot.slane %v402, %v405
        %v407 = vmul.f32 %v399, %v406
        %v408 = vmul.f32 %v401, %v406
        %v409 = vadd.f32 %v396, %v407
        %v410 = vadd.f32 %v397, %v408
        %v411 = vld [vmem:[#allocation8] sm:$0x1]
        %v412 = vlaneseq
        %v413 = vshrl.u32 %v412, 7
        %v414 = vsub.s32 0, %v413
        %v415 = vrot.slane %v411, %v414
        %v416 = vmul.f32 %v409, %v415
        %v417 = vmul.f32 %v410, %v415
        %418 = vrot.lane.b32.xlu0 %v409, 16
        %v419 = vpop.permute.xlu0 %418
        %420 = vrot.lane.b32.xlu0 %v410, 16
        %v421 = vpop.permute.xlu0 %420
        %v422 = vld [vmem:[#allocation8 + $0x1] sm:$0x1]
        %v423 = vlaneseq
        %v424 = vshrl.u32 %v423, 7
        %v425 = vsub.s32 0, %v424
        %v426 = vrot.slane %v422, %v425
        %v427 = vmul.f32 %v419, %v426
        %v428 = vmul.f32 %v421, %v426
        %v429 = vadd.f32 %v416, %v427
        %v430 = vadd.f32 %v417, %v428
        %431 = vrot.lane.b32.xlu0 %v409, 32
        %v432 = vpop.permute.xlu0 %431
        %433 = vrot.lane.b32.xlu0 %v410, 32
        %v434 = vpop.permute.xlu0 %433
        %v435 = vld [vmem:[#allocation8 + $0x2] sm:$0x1]
        %v436 = vlaneseq
        %v437 = vshrl.u32 %v436, 7
        %v438 = vsub.s32 0, %v437
        %v439 = vrot.slane %v435, %v438
        %v440 = vmul.f32 %v432, %v439
        %v441 = vmul.f32 %v434, %v439
        %v442 = vadd.f32 %v429, %v440
        %v443 = vadd.f32 %v430, %v441
        %444 = vrot.lane.b32.xlu0 %v409, 48
        %v445 = vpop.permute.xlu0 %444
        %446 = vrot.lane.b32.xlu0 %v410, 48
        %v447 = vpop.permute.xlu0 %446
        %v448 = vld [vmem:[#allocation8 + $0x3] sm:$0x1]
        %v449 = vlaneseq
        %v450 = vshrl.u32 %v449, 7
        %v451 = vsub.s32 0, %v450
        %v452 = vrot.slane %v448, %v451
        %v453 = vmul.f32 %v445, %v452
        %v454 = vmul.f32 %v447, %v452
        %v455 = vadd.f32 %v442, %v453
        %v456 = vadd.f32 %v443, %v454
        %457 = vrot.lane.b32.xlu0 %v409, 64
        %v458 = vpop.permute.xlu0 %457
        %459 = vrot.lane.b32.xlu0 %v410, 64
        %v460 = vpop.permute.xlu0 %459
        %v461 = vld [vmem:[#allocation8 + $0x4] sm:$0x1]
        %v462 = vlaneseq
        %v463 = vshrl.u32 %v462, 7
        %v464 = vsub.s32 0, %v463
        %v465 = vrot.slane %v461, %v464
        %v466 = vmul.f32 %v458, %v465
        %v467 = vmul.f32 %v460, %v465
        %v468 = vadd.f32 %v455, %v466
        %v469 = vadd.f32 %v456, %v467
        %470 = vrot.lane.b32.xlu0 %v409, 80
        %v471 = vpop.permute.xlu0 %470
        %472 = vrot.lane.b32.xlu0 %v410, 80
        %v473 = vpop.permute.xlu0 %472
        %v474 = vld [vmem:[#allocation8 + $0x5] sm:$0x1]
        %v475 = vlaneseq
        %v476 = vshrl.u32 %v475, 7
        %v477 = vsub.s32 0, %v476
        %v478 = vrot.slane %v474, %v477
        %v479 = vmul.f32 %v471, %v478
        %v480 = vmul.f32 %v473, %v478
        %v481 = vadd.f32 %v468, %v479
        %v482 = vadd.f32 %v469, %v480
        %483 = vrot.lane.b32.xlu0 %v409, 96
        %v484 = vpop.permute.xlu0 %483
        %485 = vrot.lane.b32.xlu0 %v410, 96
        %v486 = vpop.permute.xlu0 %485
        %v487 = vld [vmem:[#allocation8 + $0x6] sm:$0x1]
        %v488 = vlaneseq
        %v489 = vshrl.u32 %v488, 7
        %v490 = vsub.s32 0, %v489
        %v491 = vrot.slane %v487, %v490
        %v492 = vmul.f32 %v484, %v491
        %v493 = vmul.f32 %v486, %v491
        %v494 = vadd.f32 %v481, %v492
        %v495 = vadd.f32 %v482, %v493
        %496 = vrot.lane.b32.xlu0 %v409, 112
        %v497 = vpop.permute.xlu0 %496
        %498 = vrot.lane.b32.xlu0 %v410, 112
        %v499 = vpop.permute.xlu0 %498
        %v500 = vld [vmem:[#allocation8 + $0x7] sm:$0x1]
        %v501 = vlaneseq
        %v502 = vshrl.u32 %v501, 7
        %v503 = vsub.s32 0, %v502
        %v504 = vrot.slane %v500, %v503
        %v505 = vmul.f32 %v497, %v504
        %v506 = vmul.f32 %v499, %v504
        %v507 = vadd.f32 %v494, %v505
        %v508 = vadd.f32 %v495, %v506
        %v509 = vld [vmem:[%s3] sm:$0x1]
        %v511 = vlaneseq
        %v512 = vshrl.u32 %v511, 7
        %v513 = vsub.s32 0, %v512
        %v514 = vrot.slane %v509, %v513
        %v516 = vadd.f32 %v507, %v514
        %v517 = vadd.f32 %v508, %v514
        %518 = vst [vmem:[%s242] sm:$0xff] %v516
        %519 = vst [vmem:[%s242 + $0x8] sm:$0xff] %v517
        %s520 = sand.u32 %s119, 1
        %s521 = scalar_lea.sflag [#allocation5], %s520
        %s522 = sand.u32 %s119, 1
        %s523 = smul.addr %s522, 16
        %s524 = scalar_lea.vmem [#allocation9], %s523
        // Predicated region
        $region49: #{tpu_custom_call.1} parent=35 // pred_check
          %p525 = pneg %p129
        $region50: #{tpu_custom_call.1} parent=35 // pred_check_branch
          %527 = sbr.rel (%p525) target = $region52
        $region51: #{tpu_custom_call.1} parent=35 // pred_region
          %s529 = ssub.s32 256, 256
          %530 = vsyncadd %s521, %s529
          %s531 = smul.addr %s22, 2
          %s532 = smul.addr %s531, 128
          %s533 = scalar_lea.hbm %s4, %s532
          %s534 = sshll.u32 %s524, 4
          %s535 = int_to_ptr.vmem [resolvable:$true] %s534
          %540 = dma.vmem_to_hbm [thread:$0]  %s535, 256, %s533, %s521, 128, 128, 8
        $region52: #{tpu_custom_call.1} parent=35 // pred_fallthru
          _
      $region36: #{tpu_custom_call.1} parent=5 // pred_fallthru
        _
      %p541 = scmp.le.s32.totalorder 2, %s17
      // Predicated region
      $region53: #{tpu_custom_call.1} parent=5 // pred_check
        %p542 = pneg %p541
      $region54: #{tpu_custom_call.1} parent=5 // pred_check_branch
        %544 = sbr.rel (%p542) target = $region56
      $region55: #{tpu_custom_call.1} parent=5 // pred_region
        %s545 = ssub.s32 %s17, 2
        // Predicated region
        $region57: #{tpu_custom_call.1} parent=55 // pred_check
          %p546 = pneg %p135
        $region58: #{tpu_custom_call.1} parent=55 // pred_check_branch
          %548 = sbr.rel (%p546) target = $region60
        $region59: #{tpu_custom_call.1} parent=55 // pred_region
          %s549 = sand.u32 %s120, 1
          %s550 = scalar_lea.sflag [#allocation5], %s549
          %s551 = sand.u32 %s120, 1
          %s552 = smul.addr %s551, 16
          %s553 = scalar_lea.vmem [#allocation9], %s552
          %554 = dma.done %s550, 256
        $region60: #{tpu_custom_call.1} parent=55 // pred_fallthru
          _
      $region56: #{tpu_custom_call.1} parent=5 // pred_fallthru
        _
    $region6: #{tpu_custom_call.1} parent=1 // loop_footer
      %s21 = sadd.s32 1, %s17
    $region7: #{tpu_custom_call.1} parent=1 // loop_footer_branch
      %16 = sbr.rel target = $region3
    $region8: #{tpu_custom_call.1} parent=1 // loop_exit
      _
    %555 = vsyncpa [#allocation4], 1
    %s556 = scalar_lea.sflag [#allocation4], 1
    %557 = vsyncpa %s556, 1
    %558 = vsyncpa [#allocation7], 1
    %559 = vsyncpa [#allocation5], 1
    %s560 = scalar_lea.sflag [#allocation5], 1
    %561 = vsyncpa %s560, 1

</llo_original>
